<compile_context>
chip_gen: v5e
topology: v5e:2x2
jax: 0.10.0
libtpu: 0.0.40
codegen_flags: <defaults>
</compile_context>

<pallas_src>
import math

import jax
import jax.numpy as jnp
from jax.experimental import pallas as pl
from jax.experimental.pallas import tpu as pltpu


def _round_up(x, m):
    return ((x + m - 1) // m) * m


# ------------------------------- Pallas kernel ------------------------------ #
def _larger1dcnn_kernel(x_ref,
                        w1_ref, b1_ref, w2_ref, b2_ref,
                        w3_ref, b3_ref, w4_ref, b4_ref,
                        fw1_ref, fb1_ref, fw2_ref, fb2_ref,
                        out_ref):
    """Fused forward, specialized for L == 1.

    At L==1 every Conv1d(k=3, s=1, p=1) degenerates to a dense layer using only
    the centre tap (both neighbours are zero padding), so the whole network is
    six MXU matmuls with f32 accumulation.  Weights arrive as bf16, biases and
    all element-wise math stay in f32.
    """
    def dense(h, w_ref, b_ref, relu=True):
        y = jnp.dot(h.astype(jnp.bfloat16), w_ref[...],
                    preferred_element_type=jnp.float32) + b_ref[...]
        return jnp.maximum(y, 0.0) if relu else y

    h = x_ref[...]                      # (TILE_B, F)   f32
    h = dense(h, w1_ref, b1_ref)        # (TILE_B, 32)
    h = dense(h, w2_ref, b2_ref)        # (TILE_B, 64)
    h = dense(h, w3_ref, b3_ref)        # (TILE_B, 128)
    h = dense(h, w4_ref, b4_ref)        # (TILE_B, 256)  == torch .view(B, -1) at L==1
    h = dense(h, fw1_ref, fb1_ref)      # (TILE_B, 512)
    out_ref[...] = dense(h, fw2_ref, fb2_ref, relu=False)   # (TILE_B, NC_PAD)


# ------------------- one-time parameter relayout (load time) ---------------- #
def prepare_params(params):
    """Convert PyTorch-layout params to kernel layout ONCE (not per forward).

    - conv weights (Cout, Cin, 3) -> centre tap only, transposed to (Cin, Cout), bf16
    - fc weights transposed to (in, out), bf16; fc2 zero-padded to 128 output lanes
    - biases reshaped to (1, out), f32 (fc2 bias zero-padded to 128)
    """
    num_classes = params["fc2_w"].shape[0]
    nc_pad = _round_up(num_classes, 128)

    def conv(wn, bn):
        w = params[wn][:, :, 1].T.astype(jnp.bfloat16)        # centre tap, (Cin, Cout)
        b = params[bn].reshape(1, -1).astype(jnp.float32)
        return w, b

    w1, b1 = conv("conv1_w", "conv1_b")
    w2, b2 = conv("conv2_w", "conv2_b")
    w3, b3 = conv("conv3_w", "conv3_b")
    w4, b4 = conv("conv4_w", "conv4_b")

    fw1 = params["fc1_w"].T.astype(jnp.bfloat16)               # (256, 512)
    fb1 = params["fc1_b"].reshape(1, -1).astype(jnp.float32)

    fw2 = jnp.zeros((512, nc_pad), jnp.bfloat16).at[:, :num_classes].set(
        params["fc2_w"].T.astype(jnp.bfloat16))
    fb2 = jnp.zeros((1, nc_pad), jnp.float32).at[:, :num_classes].set(
        params["fc2_b"].astype(jnp.float32))

    weights = (w1, b1, w2, b2, w3, b3, w4, b4, fw1, fb1, fw2, fb2)
    return {"weights": weights, "num_classes": num_classes, "nc_pad": nc_pad}


# --------------------------------- forward ---------------------------------- #
_TILE_B_MAX = 256   # f32 activations: 256 rows x 512 cols ~ 0.5 MiB widest slab


def make_forward(kparams):
    """Build a jitted forward closure over the pre-laid-out weights.

    Jitting here fuses the pad / reshape / slice plumbing around the
    pallas_call into one compiled program instead of separate XLA ops.
    """
    weights = kparams["weights"]
    num_classes = kparams["num_classes"]
    nc_pad = kparams["nc_pad"]

    @jax.jit
    def forward(x_ncl):
        B, F, L = x_ncl.shape
        assert 256 * L == 256, (
            "fc1 has in_features=256, so the PyTorch forward only works for L == 1")

        x = x_ncl.reshape(B, F).astype(jnp.float32)    # squeeze L==1, channels-last

        # Single grid step for small batches (no padding waste beyond the
        # 8-row sublane multiple); 256-row tiles streamed for large batches.
        tile_b = min(_TILE_B_MAX, _round_up(B, 8))
        b_pad = _round_up(B, tile_b)
        if b_pad != B:
            x = jnp.pad(x, ((0, b_pad - B), (0, 0)))

        grid = (b_pad // tile_b,)

        # Constant index_maps: weights stay VMEM-resident across grid steps.
        w_specs = [pl.BlockSpec(w.shape, lambda i: (0, 0)) for w in weights]
        in_specs = [pl.BlockSpec((tile_b, F), lambda i: (i, 0))] + w_specs
        out_specs = pl.BlockSpec((tile_b, nc_pad), lambda i: (i, 0))

        flops = 2 * b_pad * (F * 32 + 32 * 64 + 64 * 128 + 128 * 256
                             + 256 * 512 + 512 * nc_pad)
        bytes_accessed = (sum(int(w.size) * w.dtype.itemsize for w in weights)
                          + b_pad * F * 4 + b_pad * nc_pad * 4)

        out = pl.pallas_call(
            _larger1dcnn_kernel,
            out_shape=jax.ShapeDtypeStruct((b_pad, nc_pad), jnp.float32),
            grid=grid,
            in_specs=in_specs,
            out_specs=out_specs,
            compiler_params=pltpu.CompilerParams(
                dimension_semantics=("parallel",)),
            cost_estimate=pl.CostEstimate(flops=flops, transcendentals=0,
                                          bytes_accessed=bytes_accessed),
        )(x, *weights)

        return out[:B, :num_classes]

    return forward


def larger1dcnn_forward(x_ncl, kparams):
    """Convenience wrapper (non-closure form)."""
    return make_forward(kparams)(x_ncl)


# ------------------------- deterministic parameters ------------------------ #
def init_params(key, num_features, num_classes):
    keys = jax.random.split(key, 12)

    def conv_init(kw, kb, cin, cout, ksz=3):
        bound = 1.0 / math.sqrt(cin * ksz)
        w = jax.random.uniform(kw, (cout, cin, ksz), jnp.float32, -bound, bound)
        b = jax.random.uniform(kb, (cout,), jnp.float32, -bound, bound)
        return w, b

    def fc_init(kw, kb, fin, fout):
        bound = 1.0 / math.sqrt(fin)
        w = jax.random.uniform(kw, (fout, fin), jnp.float32, -bound, bound)
        b = jax.random.uniform(kb, (fout,), jnp.float32, -bound, bound)
        return w, b

    p = {}
    p["conv1_w"], p["conv1_b"] = conv_init(keys[0], keys[1], num_features, 32)
    p["conv2_w"], p["conv2_b"] = conv_init(keys[2], keys[3], 32, 64)
    p["conv3_w"], p["conv3_b"] = conv_init(keys[4], keys[5], 64, 128)
    p["conv4_w"], p["conv4_b"] = conv_init(keys[6], keys[7], 128, 256)
    p["fc1_w"], p["fc1_b"] = fc_init(keys[8], keys[9], 256, 512)
    p["fc2_w"], p["fc2_b"] = fc_init(keys[10], keys[11], 512, num_classes)
    return p


# ------------------------------ pure-JAX reference ------------------------- #
def reference_forward(x_ncl, p):
    h = x_ncl
    for i in range(1, 5):
        w, b = p[f"conv{i}_w"], p[f"conv{i}_b"]
        h = jax.lax.conv_general_dilated(
            h, w, window_strides=(1,), padding=((1, 1),),
            dimension_numbers=("NCH", "OIH", "NCH"))
        h = jax.nn.relu(h + b[None, :, None])
    B = h.shape[0]
    h = h.reshape(B, -1)
    h = jax.nn.relu(h @ p["fc1_w"].T + p["fc1_b"])
    return h @ p["fc2_w"].T + p["fc2_b"]


# ----------------------------------- main ----------------------------------- #
if __name__ == "__main__":
    key = jax.random.PRNGKey(0)
    k_params, k_x1, k_x2 = jax.random.split(key, 3)

    num_features, seq_len, num_classes = 8, 1, 10   # L=1 required by fc1(256 -> 512)
    params = init_params(k_params, num_features, num_classes)
    kparams = prepare_params(params)                # one-time weight relayout
    forward = make_forward(kparams)                 # jitted forward closure

    # Small-batch check (single grid step, padded B=2 -> 8).
    x_small = jax.random.normal(k_x1, (2, num_features, seq_len), jnp.float32)
    out_small = jax.block_until_ready(forward(x_small))
    ref_small = jax.block_until_ready(reference_forward(x_small, params))
    assert out_small.shape == (2, num_classes)
    assert jnp.allclose(out_small, ref_small, rtol=5e-2, atol=5e-2), (
        f"small-batch mismatch: max abs err = {jnp.max(jnp.abs(out_small - ref_small))}")

    # Multi-tile check: exercises the batch grid (3 steps of 256), padding and
    # the parallel dimension semantics.
    x_big = jax.random.normal(k_x2, (600, num_features, seq_len), jnp.float32)
    out_big = jax.block_until_ready(forward(x_big))
    ref_big = jax.block_until_ready(reference_forward(x_big, params))
    assert out_big.shape == (600, num_classes)
    assert jnp.allclose(out_big, ref_big, rtol=5e-2, atol=5e-2), (
        f"big-batch mismatch: max abs err = {jnp.max(jnp.abs(out_big - ref_big))}")

    print("KERNEL_OK")
</pallas_src>

<mosaic_0001>
module attributes {stable_mosaic.version = 11 : i64} {
  func.func @_larger1dcnn_kernel(%arg0: i32, %arg1: memref<8x8xf32, #tpu.memory_space<vmem>>, %arg2: memref<8x32xbf16, #tpu.memory_space<vmem>>, %arg3: memref<1x32xf32, #tpu.memory_space<vmem>>, %arg4: memref<32x64xbf16, #tpu.memory_space<vmem>>, %arg5: memref<1x64xf32, #tpu.memory_space<vmem>>, %arg6: memref<64x128xbf16, #tpu.memory_space<vmem>>, %arg7: memref<1x128xf32, #tpu.memory_space<vmem>>, %arg8: memref<128x256xbf16, #tpu.memory_space<vmem>>, %arg9: memref<1x256xf32, #tpu.memory_space<vmem>>, %arg10: memref<256x512xbf16, #tpu.memory_space<vmem>>, %arg11: memref<1x512xf32, #tpu.memory_space<vmem>>, %arg12: memref<512x128xbf16, #tpu.memory_space<vmem>>, %arg13: memref<1x128xf32, #tpu.memory_space<vmem>>, %arg14: memref<8x128xf32, #tpu.memory_space<vmem>>) attributes {dimension_semantics = [#tpu.dimension_semantics<parallel>], iteration_bounds = array<i64: 1>, scalar_prefetch = 0 : i64, scratch_operands = 0 : i64, tpu.core_type = #tpu.core_type<tc>, window_params = [{transform_indices = @transform_0, window_bounds = array<i64: 8, 8>}, {pipeline_mode = #tpu.pipeline_mode<synchronous>, transform_indices = @transform_1, window_bounds = array<i64: 8, 32>}, {pipeline_mode = #tpu.pipeline_mode<synchronous>, transform_indices = @transform_2, window_bounds = array<i64: 1, 32>}, {pipeline_mode = #tpu.pipeline_mode<synchronous>, transform_indices = @transform_3, window_bounds = array<i64: 32, 64>}, {pipeline_mode = #tpu.pipeline_mode<synchronous>, transform_indices = @transform_4, window_bounds = array<i64: 1, 64>}, {pipeline_mode = #tpu.pipeline_mode<synchronous>, transform_indices = @transform_5, window_bounds = array<i64: 64, 128>}, {pipeline_mode = #tpu.pipeline_mode<synchronous>, transform_indices = @transform_6, window_bounds = array<i64: 1, 128>}, {pipeline_mode = #tpu.pipeline_mode<synchronous>, transform_indices = @transform_7, window_bounds = array<i64: 128, 256>}, {pipeline_mode = #tpu.pipeline_mode<synchronous>, transform_indices = @transform_8, window_bounds = array<i64: 1, 256>}, {pipeline_mode = #tpu.pipeline_mode<synchronous>, transform_indices = @transform_9, window_bounds = array<i64: 256, 512>}, {pipeline_mode = #tpu.pipeline_mode<synchronous>, transform_indices = @transform_10, window_bounds = array<i64: 1, 512>}, {pipeline_mode = #tpu.pipeline_mode<synchronous>, transform_indices = @transform_11, window_bounds = array<i64: 512, 128>}, {pipeline_mode = #tpu.pipeline_mode<synchronous>, transform_indices = @transform_12, window_bounds = array<i64: 1, 128>}, {transform_indices = @transform_13, window_bounds = array<i64: 8, 128>}]} {
    %c0 = arith.constant 0 : index
    %c0_0 = arith.constant 0 : index
    %0 = vector.load %arg1[%c0, %c0_0] : memref<8x8xf32, #tpu.memory_space<vmem>>, vector<8x8xf32>
    %1 = arith.truncf %0 : vector<8x8xf32> to vector<8x8xbf16>
    %c0_1 = arith.constant 0 : index
    %c0_2 = arith.constant 0 : index
    %2 = vector.load %arg2[%c0_1, %c0_2] : memref<8x32xbf16, #tpu.memory_space<vmem>>, vector<8x32xbf16>
    %cst = arith.constant dense<0.000000e+00> : vector<8x32xf32>
    %3 = tpu.matmul %1, %2, %cst {dimension_numbers = #tpu.dot_dimension_numbers<[1], [0], [0], [1], [0, 0, 1, 1], [], []>} : vector<8x8xbf16>, vector<8x32xbf16>, vector<8x32xf32> -> vector<8x32xf32>
    %c0_3 = arith.constant 0 : index
    %c0_4 = arith.constant 0 : index
    %4 = vector.load %arg3[%c0_3, %c0_4] : memref<1x32xf32, #tpu.memory_space<vmem>>, vector<1x32xf32>
    %5 = vector.broadcast %4 : vector<1x32xf32> to vector<8x32xf32>
    %6 = arith.addf %3, %5 : vector<8x32xf32>
    %cst_5 = arith.constant 0.000000e+00 : f32
    %7 = vector.broadcast %cst_5 : f32 to vector<8x32xf32>
    %8 = arith.maximumf %6, %7 : vector<8x32xf32>
    %9 = arith.truncf %8 : vector<8x32xf32> to vector<8x32xbf16>
    %c0_6 = arith.constant 0 : index
    %c0_7 = arith.constant 0 : index
    %10 = vector.load %arg4[%c0_6, %c0_7] : memref<32x64xbf16, #tpu.memory_space<vmem>>, vector<32x64xbf16>
    %cst_8 = arith.constant dense<0.000000e+00> : vector<8x64xf32>
    %11 = tpu.matmul %9, %10, %cst_8 {dimension_numbers = #tpu.dot_dimension_numbers<[1], [0], [0], [1], [0, 0, 1, 1], [], []>} : vector<8x32xbf16>, vector<32x64xbf16>, vector<8x64xf32> -> vector<8x64xf32>
    %c0_9 = arith.constant 0 : index
    %c0_10 = arith.constant 0 : index
    %12 = vector.load %arg5[%c0_9, %c0_10] : memref<1x64xf32, #tpu.memory_space<vmem>>, vector<1x64xf32>
    %13 = vector.broadcast %12 : vector<1x64xf32> to vector<8x64xf32>
    %14 = arith.addf %11, %13 : vector<8x64xf32>
    %cst_11 = arith.constant 0.000000e+00 : f32
    %15 = vector.broadcast %cst_11 : f32 to vector<8x64xf32>
    %16 = arith.maximumf %14, %15 : vector<8x64xf32>
    %17 = arith.truncf %16 : vector<8x64xf32> to vector<8x64xbf16>
    %c0_12 = arith.constant 0 : index
    %c0_13 = arith.constant 0 : index
    %18 = vector.load %arg6[%c0_12, %c0_13] : memref<64x128xbf16, #tpu.memory_space<vmem>>, vector<64x128xbf16>
    %cst_14 = arith.constant dense<0.000000e+00> : vector<8x128xf32>
    %19 = tpu.matmul %17, %18, %cst_14 {dimension_numbers = #tpu.dot_dimension_numbers<[1], [0], [0], [1], [0, 0, 1, 1], [], []>} : vector<8x64xbf16>, vector<64x128xbf16>, vector<8x128xf32> -> vector<8x128xf32>
    %c0_15 = arith.constant 0 : index
    %c0_16 = arith.constant 0 : index
    %20 = vector.load %arg7[%c0_15, %c0_16] : memref<1x128xf32, #tpu.memory_space<vmem>>, vector<1x128xf32>
    %21 = vector.broadcast %20 : vector<1x128xf32> to vector<8x128xf32>
    %22 = arith.addf %19, %21 : vector<8x128xf32>
    %cst_17 = arith.constant 0.000000e+00 : f32
    %23 = vector.broadcast %cst_17 : f32 to vector<8x128xf32>
    %24 = arith.maximumf %22, %23 : vector<8x128xf32>
    %25 = arith.truncf %24 : vector<8x128xf32> to vector<8x128xbf16>
    %c0_18 = arith.constant 0 : index
    %c0_19 = arith.constant 0 : index
    %26 = vector.load %arg8[%c0_18, %c0_19] : memref<128x256xbf16, #tpu.memory_space<vmem>>, vector<128x256xbf16>
    %cst_20 = arith.constant dense<0.000000e+00> : vector<8x256xf32>
    %27 = tpu.matmul %25, %26, %cst_20 {dimension_numbers = #tpu.dot_dimension_numbers<[1], [0], [0], [1], [0, 0, 1, 1], [], []>} : vector<8x128xbf16>, vector<128x256xbf16>, vector<8x256xf32> -> vector<8x256xf32>
    %c0_21 = arith.constant 0 : index
    %c0_22 = arith.constant 0 : index
    %28 = vector.load %arg9[%c0_21, %c0_22] : memref<1x256xf32, #tpu.memory_space<vmem>>, vector<1x256xf32>
    %29 = vector.broadcast %28 : vector<1x256xf32> to vector<8x256xf32>
    %30 = arith.addf %27, %29 : vector<8x256xf32>
    %cst_23 = arith.constant 0.000000e+00 : f32
    %31 = vector.broadcast %cst_23 : f32 to vector<8x256xf32>
    %32 = arith.maximumf %30, %31 : vector<8x256xf32>
    %33 = arith.truncf %32 : vector<8x256xf32> to vector<8x256xbf16>
    %c0_24 = arith.constant 0 : index
    %c0_25 = arith.constant 0 : index
    %34 = vector.load %arg10[%c0_24, %c0_25] : memref<256x512xbf16, #tpu.memory_space<vmem>>, vector<256x512xbf16>
    %cst_26 = arith.constant dense<0.000000e+00> : vector<8x512xf32>
    %35 = tpu.matmul %33, %34, %cst_26 {dimension_numbers = #tpu.dot_dimension_numbers<[1], [0], [0], [1], [0, 0, 1, 1], [], []>} : vector<8x256xbf16>, vector<256x512xbf16>, vector<8x512xf32> -> vector<8x512xf32>
    %c0_27 = arith.constant 0 : index
    %c0_28 = arith.constant 0 : index
    %36 = vector.load %arg11[%c0_27, %c0_28] : memref<1x512xf32, #tpu.memory_space<vmem>>, vector<1x512xf32>
    %37 = vector.broadcast %36 : vector<1x512xf32> to vector<8x512xf32>
    %38 = arith.addf %35, %37 : vector<8x512xf32>
    %cst_29 = arith.constant 0.000000e+00 : f32
    %39 = vector.broadcast %cst_29 : f32 to vector<8x512xf32>
    %40 = arith.maximumf %38, %39 : vector<8x512xf32>
    %41 = arith.truncf %40 : vector<8x512xf32> to vector<8x512xbf16>
    %c0_30 = arith.constant 0 : index
    %c0_31 = arith.constant 0 : index
    %42 = vector.load %arg12[%c0_30, %c0_31] : memref<512x128xbf16, #tpu.memory_space<vmem>>, vector<512x128xbf16>
    %cst_32 = arith.constant dense<0.000000e+00> : vector<8x128xf32>
    %43 = tpu.matmul %41, %42, %cst_32 {dimension_numbers = #tpu.dot_dimension_numbers<[1], [0], [0], [1], [0, 0, 1, 1], [], []>} : vector<8x512xbf16>, vector<512x128xbf16>, vector<8x128xf32> -> vector<8x128xf32>
    %c0_33 = arith.constant 0 : index
    %c0_34 = arith.constant 0 : index
    %44 = vector.load %arg13[%c0_33, %c0_34] : memref<1x128xf32, #tpu.memory_space<vmem>>, vector<1x128xf32>
    %45 = vector.broadcast %44 : vector<1x128xf32> to vector<8x128xf32>
    %46 = arith.addf %43, %45 : vector<8x128xf32>
    %c0_35 = arith.constant 0 : index
    %c0_36 = arith.constant 0 : index
    %47 = vector.load %arg14[%c0_35, %c0_36] : memref<8x128xf32, #tpu.memory_space<vmem>>, vector<8x128xf32>
    tpu.vector_store %arg14[%c0_35, %c0_36], %46 {strides = array<i32>} : memref<8x128xf32, #tpu.memory_space<vmem>>, vector<8x128xf32>,
    return
  }
  func.func @transform_0(%arg0: i32) -> (i32, i32) {
    %c0_i32 = arith.constant 0 : i32
    %c0_i32_0 = arith.constant 0 : i32
    return %arg0, %c0_i32 : i32, i32
  }
  func.func @transform_1(%arg0: i32) -> (i32, i32) {
    %c0_i32 = arith.constant 0 : i32
    %c0_i32_0 = arith.constant 0 : i32
    %c0_i32_1 = arith.constant 0 : i32
    return %c0_i32, %c0_i32_0 : i32, i32
  }
  func.func @transform_2(%arg0: i32) -> (i32, i32) {
    %c0_i32 = arith.constant 0 : i32
    %c0_i32_0 = arith.constant 0 : i32
    %c0_i32_1 = arith.constant 0 : i32
    return %c0_i32, %c0_i32_0 : i32, i32
  }
  func.func @transform_3(%arg0: i32) -> (i32, i32) {
    %c0_i32 = arith.constant 0 : i32
    %c0_i32_0 = arith.constant 0 : i32
    %c0_i32_1 = arith.constant 0 : i32
    return %c0_i32, %c0_i32_0 : i32, i32
  }
  func.func @transform_4(%arg0: i32) -> (i32, i32) {
    %c0_i32 = arith.constant 0 : i32
    %c0_i32_0 = arith.constant 0 : i32
    %c0_i32_1 = arith.constant 0 : i32
    return %c0_i32, %c0_i32_0 : i32, i32
  }
  func.func @transform_5(%arg0: i32) -> (i32, i32) {
    %c0_i32 = arith.constant 0 : i32
    %c0_i32_0 = arith.constant 0 : i32
    %c0_i32_1 = arith.constant 0 : i32
    return %c0_i32, %c0_i32_0 : i32, i32
  }
  func.func @transform_6(%arg0: i32) -> (i32, i32) {
    %c0_i32 = arith.constant 0 : i32
    %c0_i32_0 = arith.constant 0 : i32
    %c0_i32_1 = arith.constant 0 : i32
    return %c0_i32, %c0_i32_0 : i32, i32
  }
  func.func @transform_7(%arg0: i32) -> (i32, i32) {
    %c0_i32 = arith.constant 0 : i32
    %c0_i32_0 = arith.constant 0 : i32
    %c0_i32_1 = arith.constant 0 : i32
    return %c0_i32, %c0_i32_0 : i32, i32
  }
  func.func @transform_8(%arg0: i32) -> (i32, i32) {
    %c0_i32 = arith.constant 0 : i32
    %c0_i32_0 = arith.constant 0 : i32
    %c0_i32_1 = arith.constant 0 : i32
    return %c0_i32, %c0_i32_0 : i32, i32
  }
  func.func @transform_9(%arg0: i32) -> (i32, i32) {
    %c0_i32 = arith.constant 0 : i32
    %c0_i32_0 = arith.constant 0 : i32
    %c0_i32_1 = arith.constant 0 : i32
    return %c0_i32, %c0_i32_0 : i32, i32
  }
  func.func @transform_10(%arg0: i32) -> (i32, i32) {
    %c0_i32 = arith.constant 0 : i32
    %c0_i32_0 = arith.constant 0 : i32
    %c0_i32_1 = arith.constant 0 : i32
    return %c0_i32, %c0_i32_0 : i32, i32
  }
  func.func @transform_11(%arg0: i32) -> (i32, i32) {
    %c0_i32 = arith.constant 0 : i32
    %c0_i32_0 = arith.constant 0 : i32
    %c0_i32_1 = arith.constant 0 : i32
    return %c0_i32, %c0_i32_0 : i32, i32
  }
  func.func @transform_12(%arg0: i32) -> (i32, i32) {
    %c0_i32 = arith.constant 0 : i32
    %c0_i32_0 = arith.constant 0 : i32
    %c0_i32_1 = arith.constant 0 : i32
    return %c0_i32, %c0_i32_0 : i32, i32
  }
  func.func @transform_13(%arg0: i32) -> (i32, i32) {
    %c0_i32 = arith.constant 0 : i32
    %c0_i32_0 = arith.constant 0 : i32
    return %arg0, %c0_i32 : i32, i32
  }
}

</mosaic_0001>

<llo_original>
// kernel: forward.1
$region0: #{forward.1}
  #allocation0 [shape = 'u32[]', space=smem, size = 0x4, offset = 0x4, fixed_abs, tag = 'smem constant byte address 0x4 - core index']
  #allocation1 [shape = 'u32[72,128]{1,0:T(1,128)}', space=vmem, size = 0x9000, scoped, tag = 'internal scratch']
  %s0 = inlined_call_operand.vmem [shape: f32[8,8], index: 0, kind: input, shape index: {}]
  %s1 = inlined_call_operand.vmem [shape: bf16[8,32], index: 1, kind: input, shape index: {}]
  %s2 = inlined_call_operand.hbm [shape: f32[1,32], index: 2, kind: input, shape index: {}]
  %s3 = inlined_call_operand.hbm [shape: bf16[32,64], index: 3, kind: input, shape index: {}]
  %s4 = inlined_call_operand.vmem [shape: f32[1,64], index: 4, kind: input, shape index: {}]
  %s5 = inlined_call_operand.hbm [shape: bf16[64,128], index: 5, kind: input, shape index: {}]
  %s6 = inlined_call_operand.vmem [shape: f32[1,128], index: 6, kind: input, shape index: {}]
  %s7 = inlined_call_operand.hbm [shape: bf16[128,256], index: 7, kind: input, shape index: {}]
  %s8 = inlined_call_operand.vmem [shape: f32[1,256], index: 8, kind: input, shape index: {}]
  %s9 = inlined_call_operand.hbm [shape: bf16[256,512], index: 9, kind: input, shape index: {}]
  %s10 = inlined_call_operand.vmem [shape: f32[1,512], index: 10, kind: input, shape index: {}]
  %s11 = inlined_call_operand.hbm [shape: bf16[512,128], index: 11, kind: input, shape index: {}]
  %s12 = inlined_call_operand.vmem [shape: f32[1,128], index: 12, kind: input, shape index: {}]
  %s13 = inlined_call_operand.vmem [shape: f32[8,128], index: 13, kind: output, shape index: {}]
  %s14 = sld [smem:[#allocation0]]
  $region86: #{forward.1} parent=0
    _
  %s16 = ssub.s32 1, %s14
  %s17 = scalar_select 0, %s16, %s14
  $region1: #{forward.1} parent=0
    #allocation2 [shape = 'u8[512]{0}', space=vmem, size = 0x400, scoped, tag = 'input window, operand 2, single buffered']
    #allocation3 [shape = 's32[1]{0}', space=sflag, size = 0x4, scoped, tag = 'scoped memory for forward.1']
    #allocation4 [shape = 'u8[8192]{0}', space=vmem, size = 0x2000, scoped, tag = 'input window, operand 3, single buffered']
    #allocation5 [shape = 's32[1]{0}', space=sflag, size = 0x4, scoped, tag = 'scoped memory for forward.1']
    #allocation6 [shape = 'u8[16384]{0}', space=vmem, size = 0x4000, scoped, tag = 'input window, operand 5, single buffered']
    #allocation7 [shape = 'u8[65536]{0}', space=vmem, size = 0x10000, scoped, tag = 'input window, operand 7, single buffered']
    #allocation8 [shape = 's32[1]{0}', space=sflag, size = 0x4, scoped, tag = 'scoped memory for forward.1']
    #allocation9 [shape = 'u8[262144]{0}', space=vmem, size = 0x40000, scoped, tag = 'input window, operand 9, single buffered']
    #allocation10 [shape = 'u8[131072]{0}', space=vmem, size = 0x20000, scoped, tag = 'input window, operand 11, single buffered']
    #allocation11 [shape = 's32[1]{0}', space=sflag, size = 0x4, scoped, tag = 'scoped memory for forward.1']
    %18 = vsyncpa [#allocation3], 0
    %19 = vsyncpa [#allocation5], 0
    %20 = vsyncpa [#allocation8], 0
    %21 = vsyncpa [#allocation11], 0
    // Predicated region
    $region2: #{forward.1} parent=1 // pred_check
      _
    $region3: #{forward.1} parent=1 // pred_check_branch
      %23 = sbr.rel (0) target = $region5
    $region4: #{forward.1} parent=1 // pred_region
      _
    $region5: #{forward.1} parent=1 // pred_fallthru
      _
    // Predicated region
    $region6: #{forward.1} parent=1 // pred_check
      _
    $region7: #{forward.1} parent=1 // pred_check_branch
      %25 = sbr.rel (0) target = $region9
    $region8: #{forward.1} parent=1 // pred_region
      _
    $region9: #{forward.1} parent=1 // pred_fallthru
      _
    // Predicated region
    $region10: #{forward.1} parent=1 // pred_check
      _
    $region11: #{forward.1} parent=1 // pred_check_branch
      %27 = sbr.rel (0) target = $region13
    $region12: #{forward.1} parent=1 // pred_region
      %29 = vsyncadd [#allocation3], 0
      %s31 = sshll.u32 %s2, 4
      %s32 = int_to_ptr.hbm [resolvable:$true] %s31
      %s33 = sshll.u32 [#allocation2], 4
      %s34 = int_to_ptr.vmem [resolvable:$true] %s33
      %36 = dma.hbm_to_vmem [thread:$0]  %s32, 16, %s34, [#allocation3]
    $region13: #{forward.1} parent=1 // pred_fallthru
      _
    // Predicated region
    $region14: #{forward.1} parent=1 // pred_check
      _
    $region15: #{forward.1} parent=1 // pred_check_branch
      %38 = sbr.rel (0) target = $region17
    $region16: #{forward.1} parent=1 // pred_region
      %40 = vsyncadd [#allocation5], 0
      %s41 = sshll.u32 %s3, 4
      %s42 = int_to_ptr.hbm [resolvable:$true] %s41
      %s43 = sshll.u32 [#allocation4], 4
      %s44 = int_to_ptr.vmem [resolvable:$true] %s43
      %49 = dma.hbm_to_vmem [thread:$0]  %s42, 256, %s44, [#allocation5], 64, 64, 4
    $region17: #{forward.1} parent=1 // pred_fallthru
      _
    // Predicated region
    $region18: #{forward.1} parent=1 // pred_check
      _
    $region19: #{forward.1} parent=1 // pred_check_branch
      %51 = sbr.rel (0) target = $region21
    $region20: #{forward.1} parent=1 // pred_region
      _
    $region21: #{forward.1} parent=1 // pred_fallthru
      _
    // Predicated region
    $region22: #{forward.1} parent=1 // pred_check
      _
    $region23: #{forward.1} parent=1 // pred_check_branch
      %53 = sbr.rel (0) target = $region25
    $region24: #{forward.1} parent=1 // pred_region
      %55 = vsyncadd [#allocation5], 0
      %s56 = sshll.u32 %s5, 4
      %s57 = int_to_ptr.hbm [resolvable:$true] %s56
      %s58 = sshll.u32 [#allocation6], 4
      %s59 = int_to_ptr.vmem [resolvable:$true] %s58
      %64 = dma.hbm_to_vmem [thread:$0]  %s57, 512, %s59, [#allocation5], 64, 64, 4
    $region25: #{forward.1} parent=1 // pred_fallthru
      _
    // Predicated region
    $region26: #{forward.1} parent=1 // pred_check
      _
    $region27: #{forward.1} parent=1 // pred_check_branch
      %66 = sbr.rel (0) target = $region29
    $region28: #{forward.1} parent=1 // pred_region
      _
    $region29: #{forward.1} parent=1 // pred_fallthru
      _
    // Predicated region
    $region30: #{forward.1} parent=1 // pred_check
      _
    $region31: #{forward.1} parent=1 // pred_check_branch
      %68 = sbr.rel (0) target = $region33
    $region32: #{forward.1} parent=1 // pred_region
      %70 = vsyncadd [#allocation8], 0
      %s71 = sshll.u32 %s7, 4
      %s72 = int_to_ptr.hbm [resolvable:$true] %s71
      %s73 = sshll.u32 [#allocation7], 4
      %s74 = int_to_ptr.vmem [resolvable:$true] %s73
      %79 = dma.hbm_to_vmem [thread:$0]  %s72, 2048, %s74, [#allocation8], 128, 128, 8
    $region33: #{forward.1} parent=1 // pred_fallthru
      _
    // Predicated region
    $region34: #{forward.1} parent=1 // pred_check
      _
    $region35: #{forward.1} parent=1 // pred_check_branch
      %81 = sbr.rel (0) target = $region37
    $region36: #{forward.1} parent=1 // pred_region
      _
    $region37: #{forward.1} parent=1 // pred_fallthru
      _
    // Predicated region
    $region38: #{forward.1} parent=1 // pred_check
      _
    $region39: #{forward.1} parent=1 // pred_check_branch
      %83 = sbr.rel (0) target = $region41
    $region40: #{forward.1} parent=1 // pred_region
      %85 = vsyncadd [#allocation8], 0
      %s86 = sshll.u32 %s9, 4
      %s87 = int_to_ptr.hbm [resolvable:$true] %s86
      %s88 = sshll.u32 [#allocation9], 4
      %s89 = int_to_ptr.vmem [resolvable:$true] %s88
      %94 = dma.hbm_to_vmem [thread:$0]  %s87, 8192, %s89, [#allocation8], 256, 256, 16
    $region41: #{forward.1} parent=1 // pred_fallthru
      _
    // Predicated region
    $region42: #{forward.1} parent=1 // pred_check
      _
    $region43: #{forward.1} parent=1 // pred_check_branch
      %96 = sbr.rel (0) target = $region45
    $region44: #{forward.1} parent=1 // pred_region
      _
    $region45: #{forward.1} parent=1 // pred_fallthru
      _
    // Predicated region
    $region46: #{forward.1} parent=1 // pred_check
      _
    $region47: #{forward.1} parent=1 // pred_check_branch
      %98 = sbr.rel (0) target = $region49
    $region48: #{forward.1} parent=1 // pred_region
      %100 = vsyncadd [#allocation11], 0
      %s101 = sshll.u32 %s11, 4
      %s102 = int_to_ptr.hbm [resolvable:$true] %s101
      %s103 = sshll.u32 [#allocation10], 4
      %s104 = int_to_ptr.vmem [resolvable:$true] %s103
      %109 = dma.hbm_to_vmem [thread:$0]  %s102, 4096, %s104, [#allocation11], 64, 64, 4
    $region49: #{forward.1} parent=1 // pred_fallthru
      _
    // Predicated region
    $region50: #{forward.1} parent=1 // pred_check
      _
    $region51: #{forward.1} parent=1 // pred_check_branch
      %111 = sbr.rel (0) target = $region53
    $region52: #{forward.1} parent=1 // pred_region
      _
    $region53: #{forward.1} parent=1 // pred_fallthru
      _
    // Predicated region
    $region54: #{forward.1} parent=1 // pred_check
      _
    $region55: #{forward.1} parent=1 // pred_check_branch
      %113 = sbr.rel (0) target = $region57
    $region56: #{forward.1} parent=1 // pred_region
      %115 = dma.done [#allocation3], 16
    $region57: #{forward.1} parent=1 // pred_fallthru
      _
    // Predicated region
    $region58: #{forward.1} parent=1 // pred_check
      _
    $region59: #{forward.1} parent=1 // pred_check_branch
      %117 = sbr.rel (0) target = $region61
    $region60: #{forward.1} parent=1 // pred_region
      %119 = dma.done [#allocation5], 256
    $region61: #{forward.1} parent=1 // pred_fallthru
      _
    // Predicated region
    $region62: #{forward.1} parent=1 // pred_check
      _
    $region63: #{forward.1} parent=1 // pred_check_branch
      %121 = sbr.rel (0) target = $region65
    $region64: #{forward.1} parent=1 // pred_region
      %123 = dma.done [#allocation5], 512
    $region65: #{forward.1} parent=1 // pred_fallthru
      _
    // Predicated region
    $region66: #{forward.1} parent=1 // pred_check
      _
    $region67: #{forward.1} parent=1 // pred_check_branch
      %125 = sbr.rel (0) target = $region69
    $region68: #{forward.1} parent=1 // pred_region
      %127 = dma.done [#allocation8], 2048
    $region69: #{forward.1} parent=1 // pred_fallthru
      _
    // Predicated region
    $region70: #{forward.1} parent=1 // pred_check
      _
    $region71: #{forward.1} parent=1 // pred_check_branch
      %129 = sbr.rel (0) target = $region73
    $region72: #{forward.1} parent=1 // pred_region
      %131 = dma.done [#allocation8], 8192
    $region73: #{forward.1} parent=1 // pred_fallthru
      _
    // Predicated region
    $region74: #{forward.1} parent=1 // pred_check
      _
    $region75: #{forward.1} parent=1 // pred_check_branch
      %133 = sbr.rel (0) target = $region77
    $region76: #{forward.1} parent=1 // pred_region
      %135 = dma.done [#allocation11], 4096
    $region77: #{forward.1} parent=1 // pred_fallthru
      _
    %v137 = vld [vmem:[%s0] sm:$0xff]
    %v138 = vpack.c.bf16 %v137, %v137
    %v139 = vld [vmem:[%s1] sm:$0xf]
    %v140 = vld [vmem:[#allocation2] sm:$0x1]
    %v142 = vperm.slane %v140, 0
    %vm144 = vcmask 64512
    %v146 = vsel %vm144, %v138, 0
    %vm148 = vcmask 1043456
    %v150 = vsel %vm148, %v139, 0
    %152 = vmatpush.bf16.msra.mxu0 0
    %153 = vmatpush.bf16.msra.mxu0 0
    %154 = vmatpush.bf16.msra.mxu0 0
    %155 = vmatpush.bf16.msra.mxu0 0
    %156 = vmatpush.bf16.msra.mxu0 0
    %157 = vmatpush.bf16.msra.mxu0 0
    %158 = vmatpush.bf16.msra.mxu0 0
    %159 = vmatpush.bf16.msra.mxu0 %v150
    %160 = vmatmul.bf16.gmra.mxu0 %v146
    %v161 = vpop.f32.mrf.mxu0
    %v162 = vadd.f32 %v142, %v161
    %v163 = vpop.f32.mrf.mxu0
    %164 = vdwg.mxu0
    %v165 = vmax.f32 %v162, 0.0
    %v166 = vpack.c.bf16 %v165, %v165
    %v167 = vld [vmem:[#allocation4] sm:$0xf]
    %v168 = vld [vmem:[#allocation4 + $0x4] sm:$0xf]
    %v169 = vld [vmem:[#allocation4 + $0x8] sm:$0xf]
    %v170 = vld [vmem:[#allocation4 + $0xc] sm:$0xf]
    %v171 = vld [vmem:[%s4] sm:$0x1]
    %v173 = vperm.slane %v171, 0
    %v179 = vunpack.c.l.b16 %v167
    %v180 = vunpack.c.l.b16 %v168
    %v181 = vunpack.c.l.b16 %v169
    %v182 = vunpack.c.l.b16 %v170
    %v183 = vpack.c.b16 %v180, %v179
    %v184 = vpack.c.b16 %v182, %v181
    %vm187 = vcmask 261120
    %v189 = vsel %vm187, %v166, 0
    %191 = vmatpush.bf16.msra.mxu0 0
    %192 = vmatpush.bf16.msra.mxu0 0
    %193 = vmatpush.bf16.msra.mxu0 0
    %194 = vmatpush.bf16.msra.mxu0 0
    %195 = vmatpush.bf16.msra.mxu0 0
    %196 = vmatpush.bf16.msra.mxu0 0
    %197 = vmatpush.bf16.msra.mxu0 %v184
    %198 = vmatpush.bf16.msra.mxu0 %v183
    %199 = vmatmul.bf16.gmra.mxu0 %v189
    %v200 = vpop.f32.mrf.mxu0
    %v201 = vadd.f32 %v173, %v200
    %v202 = vpop.f32.mrf.mxu0
    %203 = vdwg.mxu0
    %v204 = vmax.f32 %v201, 0.0
    %v205 = vpack.c.bf16 %v204, %v204
    %v206 = vld [vmem:[#allocation6] sm:$0xf]
    %v207 = vld [vmem:[#allocation6 + $0x4] sm:$0xf]
    %v208 = vld [vmem:[#allocation6 + $0x8] sm:$0xf]
    %v209 = vld [vmem:[#allocation6 + $0xc] sm:$0xf]
    %v210 = vld [vmem:[#allocation6 + $0x10] sm:$0xf]
    %v211 = vld [vmem:[#allocation6 + $0x14] sm:$0xf]
    %v212 = vld [vmem:[#allocation6 + $0x18] sm:$0xf]
    %v213 = vld [vmem:[#allocation6 + $0x1c] sm:$0xf]
    %v214 = vld [vmem:[%s6] sm:$0x1]
    %v216 = vperm.slane %v214, 0
    %v226 = vunpack.c.l.b16 %v206
    %v227 = vunpack.c.l.b16 %v207
    %v228 = vunpack.c.l.b16 %v208
    %v229 = vunpack.c.l.b16 %v209
    %v230 = vunpack.c.l.b16 %v210
    %v231 = vunpack.c.l.b16 %v211
    %v232 = vunpack.c.l.b16 %v212
    %v233 = vunpack.c.l.b16 %v213
    %v234 = vpack.c.b16 %v227, %v226
    %v235 = vpack.c.b16 %v229, %v228
    %v236 = vpack.c.b16 %v231, %v230
    %v237 = vpack.c.b16 %v233, %v232
    %vm242 = vcmask 523264
    %v244 = vsel %vm242, %v205, 0
    %246 = vmatpush.bf16.msra.mxu0 0
    %247 = vmatpush.bf16.msra.mxu0 0
    %248 = vmatpush.bf16.msra.mxu0 0
    %249 = vmatpush.bf16.msra.mxu0 0
    %250 = vmatpush.bf16.msra.mxu0 %v237
    %251 = vmatpush.bf16.msra.mxu0 %v236
    %252 = vmatpush.bf16.msra.mxu0 %v235
    %253 = vmatpush.bf16.msra.mxu0 %v234
    %254 = vmatmul.bf16.gmra.mxu0 %v244
    %v255 = vpop.f32.mrf.mxu0
    %v256 = vadd.f32 %v216, %v255
    %v257 = vpop.f32.mrf.mxu0
    %258 = vdwg.mxu0
    %v259 = vmax.f32 %v256, 0.0
    %v260 = vpack.c.bf16 %v259, %v259
    %v261 = vld [vmem:[#allocation7] sm:$0xff]
    %v262 = vld [vmem:[#allocation7 + $0x8] sm:$0xff]
    %v263 = vld [vmem:[#allocation7 + $0x10] sm:$0xff]
    %v264 = vld [vmem:[#allocation7 + $0x18] sm:$0xff]
    %v265 = vld [vmem:[#allocation7 + $0x20] sm:$0xff]
    %v266 = vld [vmem:[#allocation7 + $0x28] sm:$0xff]
    %v267 = vld [vmem:[#allocation7 + $0x30] sm:$0xff]
    %v268 = vld [vmem:[#allocation7 + $0x38] sm:$0xff]
    %v269 = vld [vmem:[#allocation7 + $0x40] sm:$0xff]
    %v270 = vld [vmem:[#allocation7 + $0x48] sm:$0xff]
    %v271 = vld [vmem:[#allocation7 + $0x50] sm:$0xff]
    %v272 = vld [vmem:[#allocation7 + $0x58] sm:$0xff]
    %v273 = vld [vmem:[#allocation7 + $0x60] sm:$0xff]
    %v274 = vld [vmem:[#allocation7 + $0x68] sm:$0xff]
    %v275 = vld [vmem:[#allocation7 + $0x70] sm:$0xff]
    %v276 = vld [vmem:[#allocation7 + $0x78] sm:$0xff]
    %v277 = vld [vmem:[%s8] sm:$0x3]
    %v279 = vperm.slane %v277, 0
    %v280 = vperm.slane %v277, 1
    %v299 = vunpack.c.l.b16 %v261
    %v300 = vunpack.c.h.b16 %v261
    %v301 = vunpack.c.l.b16 %v262
    %v302 = vunpack.c.h.b16 %v262
    %v303 = vunpack.c.l.b16 %v263
    %v304 = vunpack.c.h.b16 %v263
    %v305 = vunpack.c.l.b16 %v264
    %v306 = vunpack.c.h.b16 %v264
    %v307 = vunpack.c.l.b16 %v265
    %v308 = vunpack.c.h.b16 %v265
    %v309 = vunpack.c.l.b16 %v266
    %v310 = vunpack.c.h.b16 %v266
    %v311 = vunpack.c.l.b16 %v267
    %v312 = vunpack.c.h.b16 %v267
    %v313 = vunpack.c.l.b16 %v268
    %v314 = vunpack.c.h.b16 %v268
    %v315 = vunpack.c.l.b16 %v269
    %v316 = vunpack.c.h.b16 %v269
    %v317 = vunpack.c.l.b16 %v270
    %v318 = vunpack.c.h.b16 %v270
    %v319 = vunpack.c.l.b16 %v271
    %v320 = vunpack.c.h.b16 %v271
    %v321 = vunpack.c.l.b16 %v272
    %v322 = vunpack.c.h.b16 %v272
    %v323 = vunpack.c.l.b16 %v273
    %v324 = vunpack.c.h.b16 %v273
    %v325 = vunpack.c.l.b16 %v274
    %v326 = vunpack.c.h.b16 %v274
    %v327 = vunpack.c.l.b16 %v275
    %v328 = vunpack.c.h.b16 %v275
    %v329 = vunpack.c.l.b16 %v276
    %v330 = vunpack.c.h.b16 %v276
    %v331 = vpack.c.b16 %v301, %v299
    %v332 = vpack.c.b16 %v302, %v300
    %v333 = vpack.c.b16 %v305, %v303
    %v334 = vpack.c.b16 %v306, %v304
    %v335 = vpack.c.b16 %v309, %v307
    %v336 = vpack.c.b16 %v310, %v308
    %v337 = vpack.c.b16 %v313, %v311
    %v338 = vpack.c.b16 %v314, %v312
    %v339 = vpack.c.b16 %v317, %v315
    %v340 = vpack.c.b16 %v318, %v316
    %v341 = vpack.c.b16 %v321, %v319
    %v342 = vpack.c.b16 %v322, %v320
    %v343 = vpack.c.b16 %v325, %v323
    %v344 = vpack.c.b16 %v326, %v324
    %v345 = vpack.c.b16 %v329, %v327
    %v346 = vpack.c.b16 %v330, %v328
    %363 = vmatpush.bf16.msra.mxu0 %v345
    %364 = vmatpush.bf16.msra.mxu0 %v343
    %365 = vmatpush.bf16.msra.mxu0 %v341
    %366 = vmatpush.bf16.msra.mxu0 %v339
    %367 = vmatpush.bf16.msra.mxu0 %v337
    %368 = vmatpush.bf16.msra.mxu0 %v335
    %369 = vmatpush.bf16.msra.mxu0 %v333
    %370 = vmatpush.bf16.msra.mxu0 %v331
    %371 = vmatmul.bf16.gmra.mxu0 %v260
    %v372 = vpop.f32.mrf.mxu0
    %v373 = vadd.f32 %v279, %v372
    %v374 = vpop.f32.mrf.mxu0
    %375 = vdwg.mxu0
    %376 = vmatpush.bf16.msra.mxu0 %v346
    %377 = vmatpush.bf16.msra.mxu0 %v344
    %378 = vmatpush.bf16.msra.mxu0 %v342
    %379 = vmatpush.bf16.msra.mxu0 %v340
    %380 = vmatpush.bf16.msra.mxu0 %v338
    %381 = vmatpush.bf16.msra.mxu0 %v336
    %382 = vmatpush.bf16.msra.mxu0 %v334
    %383 = vmatpush.bf16.msra.mxu0 %v332
    %384 = vmatmul.bf16.gmra.mxu0 %v260
    %v385 = vpop.f32.mrf.mxu0
    %v386 = vadd.f32 %v280, %v385
    %v387 = vpop.f32.mrf.mxu0
    %388 = vdwg.mxu0
    %v389 = vmax.f32 %v373, 0.0
    %v390 = vmax.f32 %v386, 0.0
    %v391 = vpack.c.bf16 %v389, %v389
    %v392 = vpack.c.bf16 %v390, %v390
    %v393 = vld [vmem:[#allocation9] sm:$0xff]
    %v394 = vld [vmem:[#allocation9 + $0x8] sm:$0xff]
    %v395 = vld [vmem:[#allocation9 + $0x10] sm:$0xff]
    %v396 = vld [vmem:[#allocation9 + $0x18] sm:$0xff]
    %v397 = vld [vmem:[#allocation9 + $0x20] sm:$0xff]
    %v398 = vld [vmem:[#allocation9 + $0x28] sm:$0xff]
    %v399 = vld [vmem:[#allocation9 + $0x30] sm:$0xff]
    %v400 = vld [vmem:[#allocation9 + $0x38] sm:$0xff]
    %v401 = vld [vmem:[#allocation9 + $0x40] sm:$0xff]
    %v402 = vld [vmem:[#allocation9 + $0x48] sm:$0xff]
    %v403 = vld [vmem:[#allocation9 + $0x50] sm:$0xff]
    %v404 = vld [vmem:[#allocation9 + $0x58] sm:$0xff]
    %v405 = vld [vmem:[#allocation9 + $0x60] sm:$0xff]
    %v406 = vld [vmem:[#allocation9 + $0x68] sm:$0xff]
    %v407 = vld [vmem:[#allocation9 + $0x70] sm:$0xff]
    %v408 = vld [vmem:[#allocation9 + $0x78] sm:$0xff]
    %v409 = vld [vmem:[#allocation9 + $0x80] sm:$0xff]
    %v410 = vld [vmem:[#allocation9 + $0x88] sm:$0xff]
    %v411 = vld [vmem:[#allocation9 + $0x90] sm:$0xff]
    %v412 = vld [vmem:[#allocation9 + $0x98] sm:$0xff]
    %v413 = vld [vmem:[#allocation9 + $0xa0] sm:$0xff]
    %v414 = vld [vmem:[#allocation9 + $0xa8] sm:$0xff]
    %v415 = vld [vmem:[#allocation9 + $0xb0] sm:$0xff]
    %v416 = vld [vmem:[#allocation9 + $0xb8] sm:$0xff]
    %v417 = vld [vmem:[#allocation9 + $0xc0] sm:$0xff]
    %v418 = vld [vmem:[#allocation9 + $0xc8] sm:$0xff]
    %v419 = vld [vmem:[#allocation9 + $0xd0] sm:$0xff]
    %v420 = vld [vmem:[#allocation9 + $0xd8] sm:$0xff]
    %v421 = vld [vmem:[#allocation9 + $0xe0] sm:$0xff]
    %v422 = vld [vmem:[#allocation9 + $0xe8] sm:$0xff]
    %v423 = vld [vmem:[#allocation9 + $0xf0] sm:$0xff]
    %v424 = vld [vmem:[#allocation9 + $0xf8] sm:$0xff]
    %v425 = vld [vmem:[#allocation9 + $0x100] sm:$0xff]
    %v426 = vld [vmem:[#allocation9 + $0x108] sm:$0xff]
    %v427 = vld [vmem:[#allocation9 + $0x110] sm:$0xff]
    %v428 = vld [vmem:[#allocation9 + $0x118] sm:$0xff]
    %v429 = vld [vmem:[#allocation9 + $0x120] sm:$0xff]
    %v430 = vld [vmem:[#allocation9 + $0x128] sm:$0xff]
    %v431 = vld [vmem:[#allocation9 + $0x130] sm:$0xff]
    %v432 = vld [vmem:[#allocation9 + $0x138] sm:$0xff]
    %v433 = vld [vmem:[#allocation9 + $0x140] sm:$0xff]
    %v434 = vld [vmem:[#allocation9 + $0x148] sm:$0xff]
    %v435 = vld [vmem:[#allocation9 + $0x150] sm:$0xff]
    %v436 = vld [vmem:[#allocation9 + $0x158] sm:$0xff]
    %v437 = vld [vmem:[#allocation9 + $0x160] sm:$0xff]
    %v438 = vld [vmem:[#allocation9 + $0x168] sm:$0xff]
    %v439 = vld [vmem:[#allocation9 + $0x170] sm:$0xff]
    %v440 = vld [vmem:[#allocation9 + $0x178] sm:$0xff]
    %v441 = vld [vmem:[#allocation9 + $0x180] sm:$0xff]
    %v442 = vld [vmem:[#allocation9 + $0x188] sm:$0xff]
    %v443 = vld [vmem:[#allocation9 + $0x190] sm:$0xff]
    %v444 = vld [vmem:[#allocation9 + $0x198] sm:$0xff]
    %v445 = vld [vmem:[#allocation9 + $0x1a0] sm:$0xff]
    %v446 = vld [vmem:[#allocation9 + $0x1a8] sm:$0xff]
    %v447 = vld [vmem:[#allocation9 + $0x1b0] sm:$0xff]
    %v448 = vld [vmem:[#allocation9 + $0x1b8] sm:$0xff]
    %v449 = vld [vmem:[#allocation9 + $0x1c0] sm:$0xff]
    %v450 = vld [vmem:[#allocation9 + $0x1c8] sm:$0xff]
    %v451 = vld [vmem:[#allocation9 + $0x1d0] sm:$0xff]
    %v452 = vld [vmem:[#allocation9 + $0x1d8] sm:$0xff]
    %v453 = vld [vmem:[#allocation9 + $0x1e0] sm:$0xff]
    %v454 = vld [vmem:[#allocation9 + $0x1e8] sm:$0xff]
    %v455 = vld [vmem:[#allocation9 + $0x1f0] sm:$0xff]
    %v456 = vld [vmem:[#allocation9 + $0x1f8] sm:$0xff]
    %v457 = vld [vmem:[%s10] sm:$0xf]
    %v459 = vperm.slane %v457, 0
    %v460 = vperm.slane %v457, 1
    %v461 = vperm.slane %v457, 2
    %v462 = vperm.slane %v457, 3
    %v531 = vunpack.c.l.b16 %v393
    %v532 = vunpack.c.h.b16 %v393
    %v533 = vunpack.c.l.b16 %v394
    %v534 = vunpack.c.h.b16 %v394
    %v535 = vunpack.c.l.b16 %v395
    %v536 = vunpack.c.h.b16 %v395
    %v537 = vunpack.c.l.b16 %v396
    %v538 = vunpack.c.h.b16 %v396
    %v539 = vunpack.c.l.b16 %v397
    %v540 = vunpack.c.h.b16 %v397
    %v541 = vunpack.c.l.b16 %v398
    %v542 = vunpack.c.h.b16 %v398
    %v543 = vunpack.c.l.b16 %v399
    %v544 = vunpack.c.h.b16 %v399
    %v545 = vunpack.c.l.b16 %v400
    %v546 = vunpack.c.h.b16 %v400
    %v547 = vunpack.c.l.b16 %v401
    %v548 = vunpack.c.h.b16 %v401
    %v549 = vunpack.c.l.b16 %v402
    %v550 = vunpack.c.h.b16 %v402
    %v551 = vunpack.c.l.b16 %v403
    %v552 = vunpack.c.h.b16 %v403
    %v553 = vunpack.c.l.b16 %v404
    %v554 = vunpack.c.h.b16 %v404
    %v555 = vunpack.c.l.b16 %v405
    %v556 = vunpack.c.h.b16 %v405
    %v557 = vunpack.c.l.b16 %v406
    %v558 = vunpack.c.h.b16 %v406
    %v559 = vunpack.c.l.b16 %v407
    %v560 = vunpack.c.h.b16 %v407
    %v561 = vunpack.c.l.b16 %v408
    %v562 = vunpack.c.h.b16 %v408
    %v563 = vunpack.c.l.b16 %v409
    %v564 = vunpack.c.h.b16 %v409
    %v565 = vunpack.c.l.b16 %v410
    %v566 = vunpack.c.h.b16 %v410
    %v567 = vunpack.c.l.b16 %v411
    %v568 = vunpack.c.h.b16 %v411
    %v569 = vunpack.c.l.b16 %v412
    %v570 = vunpack.c.h.b16 %v412
    %v571 = vunpack.c.l.b16 %v413
    %v572 = vunpack.c.h.b16 %v413
    %v573 = vunpack.c.l.b16 %v414
    %v574 = vunpack.c.h.b16 %v414
    %v575 = vunpack.c.l.b16 %v415
    %v576 = vunpack.c.h.b16 %v415
    %v577 = vunpack.c.l.b16 %v416
    %v578 = vunpack.c.h.b16 %v416
    %v579 = vunpack.c.l.b16 %v417
    %v580 = vunpack.c.h.b16 %v417
    %v581 = vunpack.c.l.b16 %v418
    %v582 = vunpack.c.h.b16 %v418
    %v583 = vunpack.c.l.b16 %v419
    %v584 = vunpack.c.h.b16 %v419
    %v585 = vunpack.c.l.b16 %v420
    %v586 = vunpack.c.h.b16 %v420
    %v587 = vunpack.c.l.b16 %v421
    %v588 = vunpack.c.h.b16 %v421
    %v589 = vunpack.c.l.b16 %v422
    %v590 = vunpack.c.h.b16 %v422
    %v591 = vunpack.c.l.b16 %v423
    %v592 = vunpack.c.h.b16 %v423
    %v593 = vunpack.c.l.b16 %v424
    %v594 = vunpack.c.h.b16 %v424
    %v595 = vunpack.c.l.b16 %v425
    %v596 = vunpack.c.h.b16 %v425
    %v597 = vunpack.c.l.b16 %v426
    %v598 = vunpack.c.h.b16 %v426
    %v599 = vunpack.c.l.b16 %v427
    %v600 = vunpack.c.h.b16 %v427
    %v601 = vunpack.c.l.b16 %v428
    %v602 = vunpack.c.h.b16 %v428
    %v603 = vunpack.c.l.b16 %v429
    %v604 = vunpack.c.h.b16 %v429
    %v605 = vunpack.c.l.b16 %v430
    %v606 = vunpack.c.h.b16 %v430
    %v607 = vunpack.c.l.b16 %v431
    %v608 = vunpack.c.h.b16 %v431
    %v609 = vunpack.c.l.b16 %v432
    %v610 = vunpack.c.h.b16 %v432
    %v611 = vunpack.c.l.b16 %v433
    %v612 = vunpack.c.h.b16 %v433
    %v613 = vunpack.c.l.b16 %v434
    %v614 = vunpack.c.h.b16 %v434
    %v615 = vunpack.c.l.b16 %v435
    %v616 = vunpack.c.h.b16 %v435
    %v617 = vunpack.c.l.b16 %v436
    %v618 = vunpack.c.h.b16 %v436
    %v619 = vunpack.c.l.b16 %v437
    %v620 = vunpack.c.h.b16 %v437
    %v621 = vunpack.c.l.b16 %v438
    %v622 = vunpack.c.h.b16 %v438
    %v623 = vunpack.c.l.b16 %v439
    %v624 = vunpack.c.h.b16 %v439
    %v625 = vunpack.c.l.b16 %v440
    %v626 = vunpack.c.h.b16 %v440
    %v627 = vunpack.c.l.b16 %v441
    %v628 = vunpack.c.h.b16 %v441
    %v629 = vunpack.c.l.b16 %v442
    %v630 = vunpack.c.h.b16 %v442
    %v631 = vunpack.c.l.b16 %v443
    %v632 = vunpack.c.h.b16 %v443
    %v633 = vunpack.c.l.b16 %v444
    %v634 = vunpack.c.h.b16 %v444
    %v635 = vunpack.c.l.b16 %v445
    %v636 = vunpack.c.h.b16 %v445
    %v637 = vunpack.c.l.b16 %v446
    %v638 = vunpack.c.h.b16 %v446
    %v639 = vunpack.c.l.b16 %v447
    %v640 = vunpack.c.h.b16 %v447
    %v641 = vunpack.c.l.b16 %v448
    %v642 = vunpack.c.h.b16 %v448
    %v643 = vunpack.c.l.b16 %v449
    %v644 = vunpack.c.h.b16 %v449
    %v645 = vunpack.c.l.b16 %v450
    %v646 = vunpack.c.h.b16 %v450
    %v647 = vunpack.c.l.b16 %v451
    %v648 = vunpack.c.h.b16 %v451
    %v649 = vunpack.c.l.b16 %v452
    %v650 = vunpack.c.h.b16 %v452
    %v651 = vunpack.c.l.b16 %v453
    %v652 = vunpack.c.h.b16 %v453
    %v653 = vunpack.c.l.b16 %v454
    %v654 = vunpack.c.h.b16 %v454
    %v655 = vunpack.c.l.b16 %v455
    %v656 = vunpack.c.h.b16 %v455
    %v657 = vunpack.c.l.b16 %v456
    %v658 = vunpack.c.h.b16 %v456
    %v659 = vpack.c.b16 %v535, %v531
    %v660 = vpack.c.b16 %v536, %v532
    %v661 = vpack.c.b16 %v537, %v533
    %v662 = vpack.c.b16 %v538, %v534
    %v663 = vpack.c.b16 %v543, %v539
    %v664 = vpack.c.b16 %v544, %v540
    %v665 = vpack.c.b16 %v545, %v541
    %v666 = vpack.c.b16 %v546, %v542
    %v667 = vpack.c.b16 %v551, %v547
    %v668 = vpack.c.b16 %v552, %v548
    %v669 = vpack.c.b16 %v553, %v549
    %v670 = vpack.c.b16 %v554, %v550
    %v671 = vpack.c.b16 %v559, %v555
    %v672 = vpack.c.b16 %v560, %v556
    %v673 = vpack.c.b16 %v561, %v557
    %v674 = vpack.c.b16 %v562, %v558
    %v675 = vpack.c.b16 %v567, %v563
    %v676 = vpack.c.b16 %v568, %v564
    %v677 = vpack.c.b16 %v569, %v565
    %v678 = vpack.c.b16 %v570, %v566
    %v679 = vpack.c.b16 %v575, %v571
    %v680 = vpack.c.b16 %v576, %v572
    %v681 = vpack.c.b16 %v577, %v573
    %v682 = vpack.c.b16 %v578, %v574
    %v683 = vpack.c.b16 %v583, %v579
    %v684 = vpack.c.b16 %v584, %v580
    %v685 = vpack.c.b16 %v585, %v581
    %v686 = vpack.c.b16 %v586, %v582
    %v687 = vpack.c.b16 %v591, %v587
    %v688 = vpack.c.b16 %v592, %v588
    %v689 = vpack.c.b16 %v593, %v589
    %v690 = vpack.c.b16 %v594, %v590
    %v691 = vpack.c.b16 %v599, %v595
    %v692 = vpack.c.b16 %v600, %v596
    %v693 = vpack.c.b16 %v601, %v597
    %v694 = vpack.c.b16 %v602, %v598
    %v695 = vpack.c.b16 %v607, %v603
    %v696 = vpack.c.b16 %v608, %v604
    %v697 = vpack.c.b16 %v609, %v605
    %v698 = vpack.c.b16 %v610, %v606
    %v699 = vpack.c.b16 %v615, %v611
    %v700 = vpack.c.b16 %v616, %v612
    %v701 = vpack.c.b16 %v617, %v613
    %v702 = vpack.c.b16 %v618, %v614
    %v703 = vpack.c.b16 %v623, %v619
    %v704 = vpack.c.b16 %v624, %v620
    %v705 = vpack.c.b16 %v625, %v621
    %v706 = vpack.c.b16 %v626, %v622
    %v707 = vpack.c.b16 %v631, %v627
    %v708 = vpack.c.b16 %v632, %v628
    %v709 = vpack.c.b16 %v633, %v629
    %v710 = vpack.c.b16 %v634, %v630
    %v711 = vpack.c.b16 %v639, %v635
    %v712 = vpack.c.b16 %v640, %v636
    %v713 = vpack.c.b16 %v641, %v637
    %v714 = vpack.c.b16 %v642, %v638
    %v715 = vpack.c.b16 %v647, %v643
    %v716 = vpack.c.b16 %v648, %v644
    %v717 = vpack.c.b16 %v649, %v645
    %v718 = vpack.c.b16 %v650, %v646
    %v719 = vpack.c.b16 %v655, %v651
    %v720 = vpack.c.b16 %v656, %v652
    %v721 = vpack.c.b16 %v657, %v653
    %v722 = vpack.c.b16 %v658, %v654
    %787 = vmatpush.bf16.msra.mxu0 %v687
    %788 = vmatpush.bf16.msra.mxu0 %v683
    %789 = vmatpush.bf16.msra.mxu0 %v679
    %790 = vmatpush.bf16.msra.mxu0 %v675
    %791 = vmatpush.bf16.msra.mxu0 %v671
    %792 = vmatpush.bf16.msra.mxu0 %v667
    %793 = vmatpush.bf16.msra.mxu0 %v663
    %794 = vmatpush.bf16.msra.mxu0 %v659
    %795 = vmatmul.bf16.gmra.mxu0 %v391
    %v796 = vpop.f32.mrf.mxu0
    %v797 = vadd.f32 %v459, %v796
    %v798 = vpop.f32.mrf.mxu0
    %799 = vdwg.mxu0
    %800 = vmatpush.bf16.msra.mxu0 %v719
    %801 = vmatpush.bf16.msra.mxu0 %v715
    %802 = vmatpush.bf16.msra.mxu0 %v711
    %803 = vmatpush.bf16.msra.mxu0 %v707
    %804 = vmatpush.bf16.msra.mxu0 %v703
    %805 = vmatpush.bf16.msra.mxu0 %v699
    %806 = vmatpush.bf16.msra.mxu0 %v695
    %807 = vmatpush.bf16.msra.mxu0 %v691
    %808 = vmatmul.bf16.gmra.mxu0 %v392
    %v809 = vpop.f32.mrf.mxu0
    %v810 = vadd.f32 %v797, %v809
    %v811 = vpop.f32.mrf.mxu0
    %812 = vdwg.mxu0
    %813 = vmatpush.bf16.msra.mxu0 %v688
    %814 = vmatpush.bf16.msra.mxu0 %v684
    %815 = vmatpush.bf16.msra.mxu0 %v680
    %816 = vmatpush.bf16.msra.mxu0 %v676
    %817 = vmatpush.bf16.msra.mxu0 %v672
    %818 = vmatpush.bf16.msra.mxu0 %v668
    %819 = vmatpush.bf16.msra.mxu0 %v664
    %820 = vmatpush.bf16.msra.mxu0 %v660
    %821 = vmatmul.bf16.gmra.mxu0 %v391
    %v822 = vpop.f32.mrf.mxu0
    %v823 = vadd.f32 %v460, %v822
    %v824 = vpop.f32.mrf.mxu0
    %825 = vdwg.mxu0
    %826 = vmatpush.bf16.msra.mxu0 %v720
    %827 = vmatpush.bf16.msra.mxu0 %v716
    %828 = vmatpush.bf16.msra.mxu0 %v712
    %829 = vmatpush.bf16.msra.mxu0 %v708
    %830 = vmatpush.bf16.msra.mxu0 %v704
    %831 = vmatpush.bf16.msra.mxu0 %v700
    %832 = vmatpush.bf16.msra.mxu0 %v696
    %833 = vmatpush.bf16.msra.mxu0 %v692
    %834 = vmatmul.bf16.gmra.mxu0 %v392
    %v835 = vpop.f32.mrf.mxu0
    %v836 = vadd.f32 %v823, %v835
    %v837 = vpop.f32.mrf.mxu0
    %838 = vdwg.mxu0
    %839 = vmatpush.bf16.msra.mxu0 %v689
    %840 = vmatpush.bf16.msra.mxu0 %v685
    %841 = vmatpush.bf16.msra.mxu0 %v681
    %842 = vmatpush.bf16.msra.mxu0 %v677
    %843 = vmatpush.bf16.msra.mxu0 %v673
    %844 = vmatpush.bf16.msra.mxu0 %v669
    %845 = vmatpush.bf16.msra.mxu0 %v665
    %846 = vmatpush.bf16.msra.mxu0 %v661
    %847 = vmatmul.bf16.gmra.mxu0 %v391
    %v848 = vpop.f32.mrf.mxu0
    %v849 = vadd.f32 %v461, %v848
    %v850 = vpop.f32.mrf.mxu0
    %851 = vdwg.mxu0
    %852 = vmatpush.bf16.msra.mxu0 %v721
    %853 = vmatpush.bf16.msra.mxu0 %v717
    %854 = vmatpush.bf16.msra.mxu0 %v713
    %855 = vmatpush.bf16.msra.mxu0 %v709
    %856 = vmatpush.bf16.msra.mxu0 %v705
    %857 = vmatpush.bf16.msra.mxu0 %v701
    %858 = vmatpush.bf16.msra.mxu0 %v697
    %859 = vmatpush.bf16.msra.mxu0 %v693
    %860 = vmatmul.bf16.gmra.mxu0 %v392
    %v861 = vpop.f32.mrf.mxu0
    %v862 = vadd.f32 %v849, %v861
    %v863 = vpop.f32.mrf.mxu0
    %864 = vdwg.mxu0
    %865 = vmatpush.bf16.msra.mxu0 %v690
    %866 = vmatpush.bf16.msra.mxu0 %v686
    %867 = vmatpush.bf16.msra.mxu0 %v682
    %868 = vmatpush.bf16.msra.mxu0 %v678
    %869 = vmatpush.bf16.msra.mxu0 %v674
    %870 = vmatpush.bf16.msra.mxu0 %v670
    %871 = vmatpush.bf16.msra.mxu0 %v666
    %872 = vmatpush.bf16.msra.mxu0 %v662
    %873 = vmatmul.bf16.gmra.mxu0 %v391
    %v874 = vpop.f32.mrf.mxu0
    %v875 = vadd.f32 %v462, %v874
    %v876 = vpop.f32.mrf.mxu0
    %877 = vdwg.mxu0
    %878 = vmatpush.bf16.msra.mxu0 %v722
    %879 = vmatpush.bf16.msra.mxu0 %v718
    %880 = vmatpush.bf16.msra.mxu0 %v714
    %881 = vmatpush.bf16.msra.mxu0 %v710
    %882 = vmatpush.bf16.msra.mxu0 %v706
    %883 = vmatpush.bf16.msra.mxu0 %v702
    %884 = vmatpush.bf16.msra.mxu0 %v698
    %885 = vmatpush.bf16.msra.mxu0 %v694
    %886 = vmatmul.bf16.gmra.mxu0 %v392
    %v887 = vpop.f32.mrf.mxu0
    %v888 = vadd.f32 %v875, %v887
    %v889 = vpop.f32.mrf.mxu0
    %890 = vdwg.mxu0
    %v891 = vmax.f32 %v810, 0.0
    %v892 = vmax.f32 %v836, 0.0
    %v893 = vmax.f32 %v862, 0.0
    %v894 = vmax.f32 %v888, 0.0
    %v895 = vpack.c.bf16 %v891, %v891
    %v896 = vpack.c.bf16 %v892, %v892
    %v897 = vpack.c.bf16 %v893, %v893
    %v898 = vpack.c.bf16 %v894, %v894
    %v899 = vld [vmem:[#allocation10] sm:$0xf]
    %v900 = vld [vmem:[#allocation10 + $0x4] sm:$0xf]
    %v901 = vld [vmem:[#allocation10 + $0x8] sm:$0xf]
    %v902 = vld [vmem:[#allocation10 + $0xc] sm:$0xf]
    %v903 = vld [vmem:[#allocation10 + $0x10] sm:$0xf]
    %v904 = vld [vmem:[#allocation10 + $0x14] sm:$0xf]
    %v905 = vld [vmem:[#allocation10 + $0x18] sm:$0xf]
    %v906 = vld [vmem:[#allocation10 + $0x1c] sm:$0xf]
    %v907 = vld [vmem:[#allocation10 + $0x20] sm:$0xf]
    %v908 = vld [vmem:[#allocation10 + $0x24] sm:$0xf]
    %v909 = vld [vmem:[#allocation10 + $0x28] sm:$0xf]
    %v910 = vld [vmem:[#allocation10 + $0x2c] sm:$0xf]
    %v911 = vld [vmem:[#allocation10 + $0x30] sm:$0xf]
    %v912 = vld [vmem:[#allocation10 + $0x34] sm:$0xf]
    %v913 = vld [vmem:[#allocation10 + $0x38] sm:$0xf]
    %v914 = vld [vmem:[#allocation10 + $0x3c] sm:$0xf]
    %v915 = vld [vmem:[#allocation10 + $0x40] sm:$0xf]
    %v916 = vld [vmem:[#allocation10 + $0x44] sm:$0xf]
    %v917 = vld [vmem:[#allocation10 + $0x48] sm:$0xf]
    %v918 = vld [vmem:[#allocation10 + $0x4c] sm:$0xf]
    %v919 = vld [vmem:[#allocation10 + $0x50] sm:$0xf]
    %v920 = vld [vmem:[#allocation10 + $0x54] sm:$0xf]
    %v921 = vld [vmem:[#allocation10 + $0x58] sm:$0xf]
    %v922 = vld [vmem:[#allocation10 + $0x5c] sm:$0xf]
    %v923 = vld [vmem:[#allocation10 + $0x60] sm:$0xf]
    %v924 = vld [vmem:[#allocation10 + $0x64] sm:$0xf]
    %v925 = vld [vmem:[#allocation10 + $0x68] sm:$0xf]
    %v926 = vld [vmem:[#allocation10 + $0x6c] sm:$0xf]
    %v927 = vld [vmem:[#allocation10 + $0x70] sm:$0xf]
    %v928 = vld [vmem:[#allocation10 + $0x74] sm:$0xf]
    %v929 = vld [vmem:[#allocation10 + $0x78] sm:$0xf]
    %v930 = vld [vmem:[#allocation10 + $0x7c] sm:$0xf]
    %v931 = vld [vmem:[#allocation10 + $0x80] sm:$0xf]
    %v932 = vld [vmem:[#allocation10 + $0x84] sm:$0xf]
    %v933 = vld [vmem:[#allocation10 + $0x88] sm:$0xf]
    %v934 = vld [vmem:[#allocation10 + $0x8c] sm:$0xf]
    %v935 = vld [vmem:[#allocation10 + $0x90] sm:$0xf]
    %v936 = vld [vmem:[#allocation10 + $0x94] sm:$0xf]
    %v937 = vld [vmem:[#allocation10 + $0x98] sm:$0xf]
    %v938 = vld [vmem:[#allocation10 + $0x9c] sm:$0xf]
    %v939 = vld [vmem:[#allocation10 + $0xa0] sm:$0xf]
    %v940 = vld [vmem:[#allocation10 + $0xa4] sm:$0xf]
    %v941 = vld [vmem:[#allocation10 + $0xa8] sm:$0xf]
    %v942 = vld [vmem:[#allocation10 + $0xac] sm:$0xf]
    %v943 = vld [vmem:[#allocation10 + $0xb0] sm:$0xf]
    %v944 = vld [vmem:[#allocation10 + $0xb4] sm:$0xf]
    %v945 = vld [vmem:[#allocation10 + $0xb8] sm:$0xf]
    %v946 = vld [vmem:[#allocation10 + $0xbc] sm:$0xf]
    %v947 = vld [vmem:[#allocation10 + $0xc0] sm:$0xf]
    %v948 = vld [vmem:[#allocation10 + $0xc4] sm:$0xf]
    %v949 = vld [vmem:[#allocation10 + $0xc8] sm:$0xf]
    %v950 = vld [vmem:[#allocation10 + $0xcc] sm:$0xf]
    %v951 = vld [vmem:[#allocation10 + $0xd0] sm:$0xf]
    %v952 = vld [vmem:[#allocation10 + $0xd4] sm:$0xf]
    %v953 = vld [vmem:[#allocation10 + $0xd8] sm:$0xf]
    %v954 = vld [vmem:[#allocation10 + $0xdc] sm:$0xf]
    %v955 = vld [vmem:[#allocation10 + $0xe0] sm:$0xf]
    %v956 = vld [vmem:[#allocation10 + $0xe4] sm:$0xf]
    %v957 = vld [vmem:[#allocation10 + $0xe8] sm:$0xf]
    %v958 = vld [vmem:[#allocation10 + $0xec] sm:$0xf]
    %v959 = vld [vmem:[#allocation10 + $0xf0] sm:$0xf]
    %v960 = vld [vmem:[#allocation10 + $0xf4] sm:$0xf]
    %v961 = vld [vmem:[#allocation10 + $0xf8] sm:$0xf]
    %v962 = vld [vmem:[#allocation10 + $0xfc] sm:$0xf]
    %v963 = vld [vmem:[%s12] sm:$0x1]
    %v965 = vperm.slane %v963, 0
    %v1031 = vunpack.c.l.b16 %v899
    %v1032 = vunpack.c.l.b16 %v900
    %v1033 = vunpack.c.l.b16 %v901
    %v1034 = vunpack.c.l.b16 %v902
    %v1035 = vunpack.c.l.b16 %v903
    %v1036 = vunpack.c.l.b16 %v904
    %v1037 = vunpack.c.l.b16 %v905
    %v1038 = vunpack.c.l.b16 %v906
    %v1039 = vunpack.c.l.b16 %v907
    %v1040 = vunpack.c.l.b16 %v908
    %v1041 = vunpack.c.l.b16 %v909
    %v1042 = vunpack.c.l.b16 %v910
    %v1043 = vunpack.c.l.b16 %v911
    %v1044 = vunpack.c.l.b16 %v912
    %v1045 = vunpack.c.l.b16 %v913
    %v1046 = vunpack.c.l.b16 %v914
    %v1047 = vunpack.c.l.b16 %v915
    %v1048 = vunpack.c.l.b16 %v916
    %v1049 = vunpack.c.l.b16 %v917
    %v1050 = vunpack.c.l.b16 %v918
    %v1051 = vunpack.c.l.b16 %v919
    %v1052 = vunpack.c.l.b16 %v920
    %v1053 = vunpack.c.l.b16 %v921
    %v1054 = vunpack.c.l.b16 %v922
    %v1055 = vunpack.c.l.b16 %v923
    %v1056 = vunpack.c.l.b16 %v924
    %v1057 = vunpack.c.l.b16 %v925
    %v1058 = vunpack.c.l.b16 %v926
    %v1059 = vunpack.c.l.b16 %v927
    %v1060 = vunpack.c.l.b16 %v928
    %v1061 = vunpack.c.l.b16 %v929
    %v1062 = vunpack.c.l.b16 %v930
    %v1063 = vunpack.c.l.b16 %v931
    %v1064 = vunpack.c.l.b16 %v932
    %v1065 = vunpack.c.l.b16 %v933
    %v1066 = vunpack.c.l.b16 %v934
    %v1067 = vunpack.c.l.b16 %v935
    %v1068 = vunpack.c.l.b16 %v936
    %v1069 = vunpack.c.l.b16 %v937
    %v1070 = vunpack.c.l.b16 %v938
    %v1071 = vunpack.c.l.b16 %v939
    %v1072 = vunpack.c.l.b16 %v940
    %v1073 = vunpack.c.l.b16 %v941
    %v1074 = vunpack.c.l.b16 %v942
    %v1075 = vunpack.c.l.b16 %v943
    %v1076 = vunpack.c.l.b16 %v944
    %v1077 = vunpack.c.l.b16 %v945
    %v1078 = vunpack.c.l.b16 %v946
    %v1079 = vunpack.c.l.b16 %v947
    %v1080 = vunpack.c.l.b16 %v948
    %v1081 = vunpack.c.l.b16 %v949
    %v1082 = vunpack.c.l.b16 %v950
    %v1083 = vunpack.c.l.b16 %v951
    %v1084 = vunpack.c.l.b16 %v952
    %v1085 = vunpack.c.l.b16 %v953
    %v1086 = vunpack.c.l.b16 %v954
    %v1087 = vunpack.c.l.b16 %v955
    %v1088 = vunpack.c.l.b16 %v956
    %v1089 = vunpack.c.l.b16 %v957
    %v1090 = vunpack.c.l.b16 %v958
    %v1091 = vunpack.c.l.b16 %v959
    %v1092 = vunpack.c.l.b16 %v960
    %v1093 = vunpack.c.l.b16 %v961
    %v1094 = vunpack.c.l.b16 %v962
    %v1095 = vpack.c.b16 %v1032, %v1031
    %v1096 = vpack.c.b16 %v1034, %v1033
    %v1097 = vpack.c.b16 %v1036, %v1035
    %v1098 = vpack.c.b16 %v1038, %v1037
    %v1099 = vpack.c.b16 %v1040, %v1039
    %v1100 = vpack.c.b16 %v1042, %v1041
    %v1101 = vpack.c.b16 %v1044, %v1043
    %v1102 = vpack.c.b16 %v1046, %v1045
    %v1103 = vpack.c.b16 %v1048, %v1047
    %v1104 = vpack.c.b16 %v1050, %v1049
    %v1105 = vpack.c.b16 %v1052, %v1051
    %v1106 = vpack.c.b16 %v1054, %v1053
    %v1107 = vpack.c.b16 %v1056, %v1055
    %v1108 = vpack.c.b16 %v1058, %v1057
    %v1109 = vpack.c.b16 %v1060, %v1059
    %v1110 = vpack.c.b16 %v1062, %v1061
    %v1111 = vpack.c.b16 %v1064, %v1063
    %v1112 = vpack.c.b16 %v1066, %v1065
    %v1113 = vpack.c.b16 %v1068, %v1067
    %v1114 = vpack.c.b16 %v1070, %v1069
    %v1115 = vpack.c.b16 %v1072, %v1071
    %v1116 = vpack.c.b16 %v1074, %v1073
    %v1117 = vpack.c.b16 %v1076, %v1075
    %v1118 = vpack.c.b16 %v1078, %v1077
    %v1119 = vpack.c.b16 %v1080, %v1079
    %v1120 = vpack.c.b16 %v1082, %v1081
    %v1121 = vpack.c.b16 %v1084, %v1083
    %v1122 = vpack.c.b16 %v1086, %v1085
    %v1123 = vpack.c.b16 %v1088, %v1087
    %v1124 = vpack.c.b16 %v1090, %v1089
    %v1125 = vpack.c.b16 %v1092, %v1091
    %v1126 = vpack.c.b16 %v1094, %v1093
    %1159 = vmatpush.bf16.msra.mxu0 %v1102
    %1160 = vmatpush.bf16.msra.mxu0 %v1101
    %1161 = vmatpush.bf16.msra.mxu0 %v1100
    %1162 = vmatpush.bf16.msra.mxu0 %v1099
    %1163 = vmatpush.bf16.msra.mxu0 %v1098
    %1164 = vmatpush.bf16.msra.mxu0 %v1097
    %1165 = vmatpush.bf16.msra.mxu0 %v1096
    %1166 = vmatpush.bf16.msra.mxu0 %v1095
    %1167 = vmatmul.bf16.gmra.mxu0 %v895
    %v1168 = vpop.f32.mrf.mxu0
    %v1169 = vadd.f32 %v965, %v1168
    %v1170 = vpop.f32.mrf.mxu0
    %1171 = vdwg.mxu0
    %1172 = vmatpush.bf16.msra.mxu0 %v1110
    %1173 = vmatpush.bf16.msra.mxu0 %v1109
    %1174 = vmatpush.bf16.msra.mxu0 %v1108
    %1175 = vmatpush.bf16.msra.mxu0 %v1107
    %1176 = vmatpush.bf16.msra.mxu0 %v1106
    %1177 = vmatpush.bf16.msra.mxu0 %v1105
    %1178 = vmatpush.bf16.msra.mxu0 %v1104
    %1179 = vmatpush.bf16.msra.mxu0 %v1103
    %1180 = vmatmul.bf16.gmra.mxu0 %v896
    %v1181 = vpop.f32.mrf.mxu0
    %v1182 = vadd.f32 %v1169, %v1181
    %v1183 = vpop.f32.mrf.mxu0
    %1184 = vdwg.mxu0
    %1185 = vmatpush.bf16.msra.mxu0 %v1118
    %1186 = vmatpush.bf16.msra.mxu0 %v1117
    %1187 = vmatpush.bf16.msra.mxu0 %v1116
    %1188 = vmatpush.bf16.msra.mxu0 %v1115
    %1189 = vmatpush.bf16.msra.mxu0 %v1114
    %1190 = vmatpush.bf16.msra.mxu0 %v1113
    %1191 = vmatpush.bf16.msra.mxu0 %v1112
    %1192 = vmatpush.bf16.msra.mxu0 %v1111
    %1193 = vmatmul.bf16.gmra.mxu0 %v897
    %v1194 = vpop.f32.mrf.mxu0
    %v1195 = vadd.f32 %v1182, %v1194
    %v1196 = vpop.f32.mrf.mxu0
    %1197 = vdwg.mxu0
    %1198 = vmatpush.bf16.msra.mxu0 %v1126
    %1199 = vmatpush.bf16.msra.mxu0 %v1125
    %1200 = vmatpush.bf16.msra.mxu0 %v1124
    %1201 = vmatpush.bf16.msra.mxu0 %v1123
    %1202 = vmatpush.bf16.msra.mxu0 %v1122
    %1203 = vmatpush.bf16.msra.mxu0 %v1121
    %1204 = vmatpush.bf16.msra.mxu0 %v1120
    %1205 = vmatpush.bf16.msra.mxu0 %v1119
    %1206 = vmatmul.bf16.gmra.mxu0 %v898
    %v1207 = vpop.f32.mrf.mxu0
    %v1208 = vadd.f32 %v1195, %v1207
    %v1209 = vpop.f32.mrf.mxu0
    %1210 = vdwg.mxu0
    %1211 = vst [vmem:[%s13] sm:$0xff] %v1208
    // Predicated region
    $region78: #{forward.1} parent=1 // pred_check
      _
    $region79: #{forward.1} parent=1 // pred_check_branch
      %1213 = sbr.rel (0) target = $region81
    $region80: #{forward.1} parent=1 // pred_region
      _
    $region81: #{forward.1} parent=1 // pred_fallthru
      _
    // Predicated region
    $region82: #{forward.1} parent=1 // pred_check
      _
    $region83: #{forward.1} parent=1 // pred_check_branch
      %1215 = sbr.rel (0) target = $region85
    $region84: #{forward.1} parent=1 // pred_region
      _
    $region85: #{forward.1} parent=1 // pred_fallthru
      _
    %1216 = vsyncpa [#allocation3], 1
    %1217 = vsyncpa [#allocation5], 1
    %1218 = vsyncpa [#allocation8], 1
    %1219 = vsyncpa [#allocation11], 1

</llo_original>
